<compile_context>
chip_gen: v5e
topology: v5e:2x2
jax: 0.10.0
libtpu: 0.0.40
codegen_flags: <defaults>
</compile_context>

<pallas_src>
import functools
import inspect

import jax
import jax.numpy as jnp
from jax import lax
from jax.experimental import pallas as pl
from jax.experimental.pallas import tpu as pltpu


# --------------------------------------------------------------------------
# Hardware-aware helpers
# --------------------------------------------------------------------------
def _vmem_capacity_bytes():
    """Physical per-core VMEM; falls back to the smallest (v7x) capacity."""
    try:
        cap = getattr(pltpu.get_tpu_info(), "vmem_capacity_bytes", None)
        if cap:
            return int(cap)
    except Exception:  # any query failure -> conservative default
        pass
    return 64 * 2**20


def _supports_single_buffered_blockspec():
    """True if this JAX exposes BlockSpec(pipeline_mode=pl.Buffered(1))."""
    try:
        return (hasattr(pl, "Buffered")
                and "pipeline_mode" in inspect.signature(pl.BlockSpec).parameters)
    except Exception:
        return False


def _row_tile_candidates(batch_size, min_rows):
    """Row-tile sizes (descending) that divide the batch -- so partner rows
    never straddle the zjs/zis half boundary -- and respect sublane packing.
    Multiples of 128 (incl. 384/768-style) first, then small powers of two."""
    cands = list(range(2048, 0, -128)) + [64, 32, 16, 8]
    return [t for t in cands
            if t % min_rows == 0 and t <= batch_size and batch_size % t == 0]


# --------------------------------------------------------------------------
# Kernel 1: rep resident in VMEM, 1-D grid over row tiles
# --------------------------------------------------------------------------
def _ntxent_rows_kernel(rep_ref, out_ref, *, batch_size, inv_temp, use_cosine,
                        tile_r, iota_pos, fold_shift):
    """One row tile of the loss.

    rep_ref : (2N, D) (normalised) representations, VMEM resident.
    out_ref : (1, 8, 128) lane-dense per-tile partial loss sum (broadcast).
    """
    n2 = rep_ref.shape[0]
    i = pl.program_id(0)
    row_off = pl.multiple_of(i * tile_r, tile_r)

    # Row tile sliced out of the resident rep (no second pipelined input).
    lhs = rep_ref[pl.ds(row_off, tile_r), :]
    lhs_f32 = lhs.astype(jnp.float32)
    # Fold 1/T into the LHS MXU operand only -> the matmul output is `logits`.
    lhs_scaled = (lhs_f32 * inv_temp).astype(lhs.dtype)
    lhs_scaled_f32 = lhs_scaled.astype(jnp.float32)

    # (tile_r, 2N) logits, contracting over D in NT form (no rep.T copy).
    logits = lax.dot_general(
        lhs_scaled, rep_ref[...],
        dimension_numbers=(((1,), (1,)), ((), ())),
        preferred_element_type=jnp.float32)

    need_iota = iota_pos or (not use_cosine)
    if need_iota:
        col_ids = lax.broadcasted_iota(jnp.int32, (tile_r, n2), 1)
        row_ids = row_off + lax.broadcasted_iota(jnp.int32, (tile_r, n2), 0)

    # Positive logit of global row g is logits[g, (g + N) % 2N].
    if iota_pos:
        # Tiny / odd batch single-tile path: extract straight from logits.
        pos = jnp.sum(
            jnp.where(col_ids == (row_ids + batch_size) % n2, logits, 0.0),
            axis=-1, keepdims=True)
    else:
        # tile_r divides N, so the partner rows of this tile are one
        # contiguous tile-aligned slice of rep: an O(tile_r * D) product.
        poff = pl.multiple_of((i * tile_r + batch_size) % n2, tile_r)
        partner = rep_ref[pl.ds(poff, tile_r), :].astype(jnp.float32)
        pos = jnp.sum(lhs_scaled_f32 * partner, axis=-1, keepdims=True)

    if use_cosine:
        # cosine sim <= 1 (up to bf16 rounding of the normalised rows), so no
        # row max / diag mask is needed: any fixed shift keeps exp() in range
        # and logsumexp is exact for an arbitrary shift.  The self term is
        # removed analytically, recomputed from the exact operands the MXU
        # consumed (sub-f32 products are exact in f32); the residual mismatch
        # is accumulation-order noise only.
        self_logit = jnp.sum(lhs_scaled_f32 * lhs_f32, axis=-1, keepdims=True)
        if fold_shift:
            # Hoist the constant shift out of the per-element exp entirely
            # (wrapper guards: only when 1/T <= 60 so exp(logits) cannot
            # overflow even with slight bf16 excess above 1/T).
            row_sum = jnp.sum(jnp.exp(logits), axis=-1, keepdims=True)
            row_sum = row_sum - jnp.exp(self_logit)
            lse = jnp.log(jnp.maximum(row_sum, 1e-30))
        else:
            row_sum = jnp.sum(jnp.exp(logits - inv_temp), axis=-1, keepdims=True)
            row_sum = row_sum - jnp.exp(self_logit - inv_temp)
            lse = inv_temp + jnp.log(jnp.maximum(row_sum, 1e-30))
    else:
        # Dot similarity, mask free: unmasked row max plus analytic removal of
        # the diagonal term.  The diagonal is taken from the MXU output itself
        # (one fused iota/where reduce, no (tile_r, 2N) masked -inf
        # intermediate kept live) so the subtraction cancels the in-sum term
        # exactly regardless of how the MXU decomposes f32 operands.
        self_logit = jnp.sum(jnp.where(col_ids == row_ids, logits, 0.0),
                             axis=-1, keepdims=True)
        m = jnp.max(logits, axis=-1, keepdims=True)
        row_sum = jnp.sum(jnp.exp(logits - m), axis=-1, keepdims=True)
        row_sum = row_sum - jnp.exp(self_logit - m)
        lse = m + jnp.log(jnp.maximum(row_sum, 1e-30))

    partial = jnp.sum(lse - pos)
    out_ref[...] = jnp.broadcast_to(partial, out_ref.shape).astype(out_ref.dtype)


# --------------------------------------------------------------------------
# Kernel 2: column-tiled fallback (rep does not fit VMEM), 2-D grid
# --------------------------------------------------------------------------
def _ntxent_cols_kernel(lhs_ref, col_ref, out_ref, m_sc, l_sc, pos_sc, *,
                        inv_temp, tile_r, tile_c, half_tiles):
    """Flash-style online logsumexp over column tiles of the rep.

    lhs_ref : (tile_r, D) row tile,  col_ref : (tile_c, D) column tile.
    out_ref : (1, 8, 128) per-row-tile partial loss sum (written at finalize).
    m_sc / l_sc / pos_sc : (tile_r, 1) f32 running max / sum / positive logit.
    """
    i = pl.program_id(0)
    j = pl.program_id(1)
    nj = pl.num_programs(1)

    @pl.when(j == 0)
    def _init():
        m_sc[...] = jnp.full(m_sc.shape, -jnp.inf, dtype=m_sc.dtype)
        l_sc[...] = jnp.zeros(l_sc.shape, dtype=l_sc.dtype)
        pos_sc[...] = jnp.zeros(pos_sc.shape, dtype=pos_sc.dtype)

    lhs_f32 = lhs_ref[...].astype(jnp.float32)
    lhs_scaled = (lhs_f32 * inv_temp).astype(lhs_ref.dtype)
    col = col_ref[...]

    s = lax.dot_general(
        lhs_scaled, col,
        dimension_numbers=(((1,), (1,)), ((), ())),
        preferred_element_type=jnp.float32)

    # Self-similarity entries only exist in the diagonal block; the mask is a
    # local (tile_r, tile_c) compare, never a full-width (tile_r, 2N) one.
    r_ids = i * tile_r + lax.broadcasted_iota(jnp.int32, s.shape, 0)
    c_ids = j * tile_c + lax.broadcasted_iota(jnp.int32, s.shape, 1)
    s = jnp.where(r_ids == c_ids, -jnp.inf, s)

    # The partner rows of row tile i form exactly column tile
    # (i + N/tile) mod num_tiles, row-aligned -> O(tile_r * D) product.
    @pl.when(j == (i + half_tiles) % nj)
    def _positive():
        pos_sc[...] = jnp.sum(
            lhs_scaled.astype(jnp.float32) * col.astype(jnp.float32),
            axis=-1, keepdims=True)

    # Online logsumexp update across column tiles.
    m_prev = m_sc[...]
    m_new = jnp.maximum(m_prev, jnp.max(s, axis=-1, keepdims=True))
    l_sc[...] = (l_sc[...] * jnp.exp(m_prev - m_new)
                 + jnp.sum(jnp.exp(s - m_new), axis=-1, keepdims=True))
    m_sc[...] = m_new

    @pl.when(j == nj - 1)
    def _finalize():
        lse = m_sc[...] + jnp.log(jnp.maximum(l_sc[...], 1e-30))
        partial = jnp.sum(lse - pos_sc[...])
        out_ref[...] = jnp.broadcast_to(partial, out_ref.shape).astype(out_ref.dtype)


# --------------------------------------------------------------------------
# Wrapper
# --------------------------------------------------------------------------
def ntxent_loss(zis, zjs, temperature=0.5, use_cosine_similarity=True,
                compute_dtype=jnp.bfloat16, force_column_tiles=False):
    """Pallas TPU forward pass of NTXentLoss(device, N, T, use_cosine)."""
    if zis.ndim != 2 or zis.shape != zjs.shape:
        raise ValueError("zis / zjs must both be (batch, dim) with equal shapes")
    batch_size, d = zis.shape
    n2 = 2 * batch_size
    compute_dtype = jnp.dtype(compute_dtype)
    itemsize = compute_dtype.itemsize
    inv_temp = 1.0 / float(temperature)
    use_cos = bool(use_cosine_similarity)

    # concat([zjs, zis]) + cosine row-normalisation + cast: one O(2N*D)
    # producer pass fused by XLA; normalising here replaces the O((2N)^2)
    # cosine divide a naive kernel would do.
    rep = jnp.concatenate([zjs, zis], axis=0).astype(jnp.float32)
    if use_cos:
        sq = jnp.sum(rep * rep, axis=-1, keepdims=True)
        rep = rep * lax.rsqrt(jnp.maximum(sq, 1e-16))  # ~ torch eps=1e-8 clamp
    rep = rep.astype(compute_dtype)

    capacity = _vmem_capacity_bytes()
    budget = (capacity * 3) // 4           # generation-aware working-set budget
    vmem_cap = capacity - 4 * 2**20        # never ask the compiler for > physical
    min_rows = 8 * (4 // itemsize)         # sublane packing: 8 rows f32, 16 bf16
    candidates = _row_tile_candidates(batch_size, min_rows)

    def rows_live(t, with_iota):
        extra = 2 * t * n2 * 4 if with_iota else 0
        return (2 * n2 * d * itemsize      # resident rep (2 bufs, conservative)
                + 3 * t * n2 * 4           # f32 logits tile + elementwise temps
                + 4 * t * d * 4            # f32 row / partner slices
                + extra + 2 * 8 * 128 * 4)

    def cols_live(t):
        return (4 * t * d * itemsize       # lhs/col tiles, double-buffered
                + 3 * t * t * 4            # f32 logits block + temps
                + 4 * t * d * 4            # f32 upcasts
                + 3 * t * 4 + 2 * 8 * 128 * 4)

    def rows_forward(tile_r, iota_pos):
        num_tiles = n2 // tile_r
        fold_shift = use_cos and inv_temp <= 60.0
        kernel = functools.partial(
            _ntxent_rows_kernel, batch_size=batch_size, inv_temp=inv_temp,
            use_cosine=use_cos, tile_r=tile_r, iota_pos=iota_pos,
            fold_shift=fold_shift)
        vmem_limit = int(min(vmem_cap,
                             max(32 * 2**20,
                                 rows_live(tile_r, iota_pos) + 8 * 2**20)))

        def call(single_buffer_rep):
            # The resident rep's index map is constant, so one buffer suffices
            # -- request it when the installed JAX supports pipeline_mode.
            rep_kwargs = ({"pipeline_mode": pl.Buffered(1)}
                          if single_buffer_rep else {})
            return pl.pallas_call(
                kernel,
                out_shape=jax.ShapeDtypeStruct((num_tiles, 8, 128), jnp.float32),
                grid=(num_tiles,),
                in_specs=[pl.BlockSpec((n2, d), lambda i: (0, 0), **rep_kwargs)],
                out_specs=pl.BlockSpec((1, 8, 128), lambda i: (i, 0, 0)),
                compiler_params=pltpu.CompilerParams(
                    dimension_semantics=("parallel",),   # megacore row sharding
                    vmem_limit_bytes=vmem_limit),
            )(rep)

        if _supports_single_buffered_blockspec():
            try:
                return call(True)
            except Exception:   # Buffered(1) rejected by this build -> retry
                pass
        return call(False)

    def cols_forward(tile_rc):
        num_tiles = n2 // tile_rc
        half_tiles = batch_size // tile_rc
        kernel = functools.partial(
            _ntxent_cols_kernel, inv_temp=inv_temp, tile_r=tile_rc,
            tile_c=tile_rc, half_tiles=half_tiles)
        vmem_limit = int(min(vmem_cap,
                             max(32 * 2**20, cols_live(tile_rc) + 8 * 2**20)))
        return pl.pallas_call(
            kernel,
            out_shape=jax.ShapeDtypeStruct((num_tiles, 8, 128), jnp.float32),
            grid=(num_tiles, num_tiles),
            in_specs=[pl.BlockSpec((tile_rc, d), lambda i, j: (i, 0)),
                      pl.BlockSpec((tile_rc, d), lambda i, j: (j, 0))],
            out_specs=pl.BlockSpec((1, 8, 128), lambda i, j: (i, 0, 0)),
            scratch_shapes=[pltpu.VMEM((tile_rc, 1), jnp.float32),
                            pltpu.VMEM((tile_rc, 1), jnp.float32),
                            pltpu.VMEM((tile_rc, 1), jnp.float32)],
            compiler_params=pltpu.CompilerParams(
                dimension_semantics=("parallel", "arbitrary"),
                vmem_limit_bytes=vmem_limit),
        )(rep, rep)

    # ---------------- path selection ----------------
    use_rows, tile_rows, iota_pos = False, None, False
    if candidates:
        if not force_column_tiles:
            fitting = [t for t in candidates if rows_live(t, False) <= budget]
            if fitting:
                use_rows, tile_rows = True, fitting[0]   # largest fitting tile
    else:
        # Tiny / odd batch: single tile with iota-based positive extraction.
        # TODO(synk): a batch that is both huge and indivisible by any 8/16-row
        # tile also lands here; pad the batch upstream for that case.
        use_rows, tile_rows, iota_pos = True, n2, True

    if use_rows:
        out = rows_forward(tile_rows, iota_pos)
    else:
        tile_cols = next((t for t in candidates if cols_live(t) <= budget),
                         candidates[-1])
        out = cols_forward(tile_cols)

    # Lane-dense per-tile partial sums; final reduction outside the kernel.
    return jnp.sum(out[:, 0, 0]) / n2


# --------------------------------------------------------------------------
# Pure-JAX reference (mirror of the torch forward) for testing
# --------------------------------------------------------------------------
def _ntxent_reference(zis, zjs, temperature, use_cosine_similarity):
    rep = jnp.concatenate([zjs, zis], axis=0).astype(jnp.float32)
    n2 = rep.shape[0]
    n = n2 // 2
    if use_cosine_similarity:
        norm = jnp.sqrt(jnp.sum(rep * rep, axis=-1, keepdims=True))
        sim = (rep @ rep.T) / jnp.maximum(norm * norm.T, 1e-8)
    else:
        sim = rep @ rep.T
    logits = sim / temperature
    idx = jnp.arange(n2)
    pos = logits[idx, (idx + n) % n2]
    masked = jnp.where(jnp.eye(n2, dtype=bool), -jnp.inf, logits)
    lse = jax.scipy.special.logsumexp(masked, axis=-1)
    return jnp.sum(lse - pos) / n2


if __name__ == "__main__":
    key = jax.random.PRNGKey(0)
    k1, k2 = jax.random.split(key)

    batch, dim = 16, 64                 # 2N = 32 rows
    zis = jax.random.normal(k1, (batch, dim), dtype=jnp.float32)
    zjs = jax.random.normal(k2, (batch, dim), dtype=jnp.float32)

    cases = [
        ("cosine/bf16-default",
         ntxent_loss(zis, zjs, 0.5, True),
         _ntxent_reference(zis, zjs, 0.5, True), 5e-2),
        ("cosine/f32",
         ntxent_loss(zis, zjs, 0.5, True, compute_dtype=jnp.float32),
         _ntxent_reference(zis, zjs, 0.5, True), 2e-2),
        ("dot/f32",
         ntxent_loss(0.3 * zis, 0.3 * zjs, 0.5, False,
                     compute_dtype=jnp.float32),
         _ntxent_reference(0.3 * zis, 0.3 * zjs, 0.5, False), 2e-2),
        ("cosine/column-tiled/bf16",
         ntxent_loss(zis, zjs, 0.5, True, force_column_tiles=True),
         _ntxent_reference(zis, zjs, 0.5, True), 5e-2),
        ("dot/column-tiled/f32",
         ntxent_loss(0.3 * zis, 0.3 * zjs, 0.5, False,
                     compute_dtype=jnp.float32, force_column_tiles=True),
         _ntxent_reference(0.3 * zis, 0.3 * zjs, 0.5, False), 2e-2),
        ("cosine/tiny-single-tile",
         ntxent_loss(zis[:4, :32], zjs[:4, :32], 0.5, True),
         _ntxent_reference(zis[:4, :32], zjs[:4, :32], 0.5, True), 5e-2),
    ]

    for name, got, want, tol in cases:
        got = float(jax.block_until_ready(got))
        want = float(want)
        assert abs(got - want) <= tol * max(1.0, abs(want)), (name, got, want)

    print("KERNEL_OK")
</pallas_src>

<mosaic_0001>
module attributes {stable_mosaic.version = 11 : i64} {
  func.func @_ntxent_rows_kernel(%arg0: i32, %arg1: memref<32x64xbf16, #tpu.memory_space<vmem>>, %arg2: memref<1x8x128xf32, #tpu.memory_space<vmem>>) attributes {dimension_semantics = [#tpu.dimension_semantics<parallel>], iteration_bounds = array<i64: 2>, scalar_prefetch = 0 : i64, scratch_operands = 0 : i64, tpu.core_type = #tpu.core_type<tc>, window_params = [{pipeline_mode = #tpu.pipeline_mode<synchronous>, transform_indices = @transform_0, window_bounds = array<i64: 32, 64>}, {transform_indices = @transform_1, window_bounds = array<i64: 1, 8, 128>}]} {
    %c16_i32 = arith.constant 16 : i32
    %0 = arith.muli %arg0, %c16_i32 : i32
    %1 = tpu.assume_multiple %0, 16 : i32
    %2 = arith.index_cast %1 : i32 to index
    %c0 = arith.constant 0 : index
    %3 = vector.load %arg1[%2, %c0] : memref<32x64xbf16, #tpu.memory_space<vmem>>, vector<16x64xbf16>
    %4 = arith.extf %3 : vector<16x64xbf16> to vector<16x64xf32>
    %cst = arith.constant 2.000000e+00 : f32
    %5 = vector.broadcast %cst : f32 to vector<16x64xf32>
    %6 = arith.mulf %4, %5 : vector<16x64xf32>
    %7 = arith.truncf %6 : vector<16x64xf32> to vector<16x64xbf16>
    %8 = arith.extf %7 : vector<16x64xbf16> to vector<16x64xf32>
    %c0_0 = arith.constant 0 : index
    %c0_1 = arith.constant 0 : index
    %9 = vector.load %arg1[%c0_0, %c0_1] : memref<32x64xbf16, #tpu.memory_space<vmem>>, vector<32x64xbf16>
    %cst_2 = arith.constant dense<0.000000e+00> : vector<16x32xf32>
    %10 = tpu.matmul %7, %9, %cst_2 {dimension_numbers = #tpu.dot_dimension_numbers<[1], [1], [0], [0], [0, 0, 1, 0], [], []>} : vector<16x64xbf16>, vector<32x64xbf16>, vector<16x32xf32> -> vector<16x32xf32>
    %c16_i32_3 = arith.constant 16 : i32
    %11 = arith.muli %arg0, %c16_i32_3 : i32
    %c16_i32_4 = arith.constant 16 : i32
    %12 = arith.addi %11, %c16_i32_4 : i32
    %c32_i32 = arith.constant 32 : i32
    %c0_i32 = arith.constant 0 : i32
    %13 = arith.cmpi eq, %c32_i32, %c0_i32 : i32
    %c1_i32 = arith.constant 1 : i32
    %14 = arith.select %13, %c1_i32, %c32_i32 : i32
    %15 = arith.remsi %12, %14 : i32
    %c0_i32_5 = arith.constant 0 : i32
    %16 = arith.cmpi ne, %15, %c0_i32_5 : i32
    %c0_i32_6 = arith.constant 0 : i32
    %17 = arith.cmpi slt, %15, %c0_i32_6 : i32
    %c0_i32_7 = arith.constant 0 : i32
    %18 = arith.cmpi slt, %14, %c0_i32_7 : i32
    %19 = arith.xori %17, %18 : i1
    %20 = arith.andi %19, %16 : i1
    %21 = arith.addi %15, %14 : i32
    %22 = arith.select %20, %21, %15 : i32
    %23 = tpu.assume_multiple %22, 16 : i32
    %24 = arith.index_cast %23 : i32 to index
    %c0_8 = arith.constant 0 : index
    %25 = vector.load %arg1[%24, %c0_8] : memref<32x64xbf16, #tpu.memory_space<vmem>>, vector<16x64xbf16>
    %26 = arith.extf %25 : vector<16x64xbf16> to vector<16x64xf32>
    %27 = arith.mulf %8, %26 : vector<16x64xf32>
    %cst_9 = arith.constant dense<0.000000e+00> : vector<16xf32>
    %28 = vector.multi_reduction <add>, %27, %cst_9 [1] : vector<16x64xf32> to vector<16xf32>
    %29 = vector.shape_cast %28 : vector<16xf32> to vector<16x1xf32>
    %30 = arith.mulf %8, %4 : vector<16x64xf32>
    %cst_10 = arith.constant dense<0.000000e+00> : vector<16xf32>
    %31 = vector.multi_reduction <add>, %30, %cst_10 [1] : vector<16x64xf32> to vector<16xf32>
    %32 = vector.shape_cast %31 : vector<16xf32> to vector<16x1xf32>
    %33 = math.exp %10 : vector<16x32xf32>
    %cst_11 = arith.constant dense<0.000000e+00> : vector<16xf32>
    %34 = vector.multi_reduction <add>, %33, %cst_11 [1] : vector<16x32xf32> to vector<16xf32>
    %35 = vector.shape_cast %34 : vector<16xf32> to vector<16x1xf32>
    %36 = math.exp %32 : vector<16x1xf32>
    %37 = arith.subf %35, %36 : vector<16x1xf32>
    %cst_12 = arith.constant 1.000000e-30 : f32
    %38 = vector.broadcast %cst_12 : f32 to vector<16x1xf32>
    %39 = arith.maximumf %37, %38 : vector<16x1xf32>
    %40 = math.log %39 : vector<16x1xf32>
    %41 = arith.subf %40, %29 : vector<16x1xf32>
    %42 = vector.shape_cast %41 : vector<16x1xf32> to vector<1x16x1xf32>
    %cst_13 = arith.constant dense<0.000000e+00> : vector<1xf32>
    %43 = vector.multi_reduction <add>, %42, %cst_13 [1, 2] : vector<1x16x1xf32> to vector<1xf32>
    %44 = vector.shape_cast %43 : vector<1xf32> to vector<1x1x1xf32>
    %45 = vector.extract %44[0, 0, 0] : f32 from vector<1x1x1xf32>
    %46 = vector.broadcast %45 : f32 to vector<1x8x128xf32>
    %c0_14 = arith.constant 0 : index
    %c0_15 = arith.constant 0 : index
    %c0_16 = arith.constant 0 : index
    %47 = vector.load %arg2[%c0_14, %c0_15, %c0_16] : memref<1x8x128xf32, #tpu.memory_space<vmem>>, vector<1x8x128xf32>
    tpu.vector_store %arg2[%c0_14, %c0_15, %c0_16], %46 {strides = array<i32>} : memref<1x8x128xf32, #tpu.memory_space<vmem>>, vector<1x8x128xf32>,
    return
  }
  func.func @transform_0(%arg0: i32) -> (i32, i32) {
    %c0_i32 = arith.constant 0 : i32
    %c0_i32_0 = arith.constant 0 : i32
    %c0_i32_1 = arith.constant 0 : i32
    return %c0_i32, %c0_i32_0 : i32, i32
  }
  func.func @transform_1(%arg0: i32) -> (i32, i32, i32) {
    %c0_i32 = arith.constant 0 : i32
    %c0_i32_0 = arith.constant 0 : i32
    %c0_i32_1 = arith.constant 0 : i32
    return %arg0, %c0_i32, %c0_i32_0 : i32, i32, i32
  }
}

module attributes {stable_mosaic.version = 11 : i64} {
  func.func @_ntxent_rows_kernel(%arg0: i32, %arg1: memref<32x64xbf16, #tpu.memory_space<vmem>>, %arg2: memref<1x8x128xf32, #tpu.memory_space<vmem>>) attributes {dimension_semantics = [#tpu.dimension_semantics<parallel>], iteration_bounds = array<i64: 2>, scalar_prefetch = 0 : i64, scratch_operands = 0 : i64, tpu.core_type = #tpu.core_type<tc>, window_params = [{pipeline_mode = #tpu.pipeline_mode<synchronous>, transform_indices = @transform_0, window_bounds = array<i64: 32, 64>}, {transform_indices = @transform_1, window_bounds = array<i64: 1, 8, 128>}]} {
    %c16_i32 = arith.constant 16 : i32
    %0 = arith.muli %arg0, %c16_i32 : i32
    %1 = tpu.assume_multiple %0, 16 : i32
    %2 = arith.index_cast %1 : i32 to index
    %c0 = arith.constant 0 : index
    %3 = vector.load %arg1[%2, %c0] : memref<32x64xbf16, #tpu.memory_space<vmem>>, vector<16x64xbf16>
    %4 = arith.extf %3 : vector<16x64xbf16> to vector<16x64xf32>
    %cst = arith.constant 2.000000e+00 : f32
    %5 = vector.broadcast %cst : f32 to vector<16x64xf32>
    %6 = arith.mulf %4, %5 : vector<16x64xf32>
    %7 = arith.truncf %6 : vector<16x64xf32> to vector<16x64xbf16>
    %8 = arith.extf %7 : vector<16x64xbf16> to vector<16x64xf32>
    %c0_0 = arith.constant 0 : index
    %c0_1 = arith.constant 0 : index
    %9 = vector.load %arg1[%c0_0, %c0_1] : memref<32x64xbf16, #tpu.memory_space<vmem>>, vector<32x64xbf16>
    %cst_2 = arith.constant dense<0.000000e+00> : vector<16x32xf32>
    %10 = tpu.matmul %7, %9, %cst_2 {dimension_numbers = #tpu.dot_dimension_numbers<[1], [1], [0], [0], [0, 0, 1, 0], [], []>} : vector<16x64xbf16>, vector<32x64xbf16>, vector<16x32xf32> -> vector<16x32xf32>
    %c16_i32_3 = arith.constant 16 : i32
    %11 = arith.muli %arg0, %c16_i32_3 : i32
    %c16_i32_4 = arith.constant 16 : i32
    %12 = arith.addi %11, %c16_i32_4 : i32
    %c32_i32 = arith.constant 32 : i32
    %c0_i32 = arith.constant 0 : i32
    %13 = arith.cmpi eq, %c32_i32, %c0_i32 : i32
    %c1_i32 = arith.constant 1 : i32
    %14 = arith.select %13, %c1_i32, %c32_i32 : i32
    %15 = arith.remsi %12, %14 : i32
    %c0_i32_5 = arith.constant 0 : i32
    %16 = arith.cmpi ne, %15, %c0_i32_5 : i32
    %c0_i32_6 = arith.constant 0 : i32
    %17 = arith.cmpi slt, %15, %c0_i32_6 : i32
    %c0_i32_7 = arith.constant 0 : i32
    %18 = arith.cmpi slt, %14, %c0_i32_7 : i32
    %19 = arith.xori %17, %18 : i1
    %20 = arith.andi %19, %16 : i1
    %21 = arith.addi %15, %14 : i32
    %22 = arith.select %20, %21, %15 : i32
    %23 = tpu.assume_multiple %22, 16 : i32
    %24 = arith.index_cast %23 : i32 to index
    %c0_8 = arith.constant 0 : index
    %25 = vector.load %arg1[%24, %c0_8] : memref<32x64xbf16, #tpu.memory_space<vmem>>, vector<16x64xbf16>
    %26 = arith.extf %25 : vector<16x64xbf16> to vector<16x64xf32>
    %27 = arith.mulf %8, %26 : vector<16x64xf32>
    %cst_9 = arith.constant dense<0.000000e+00> : vector<16xf32>
    %28 = vector.multi_reduction <add>, %27, %cst_9 [1] : vector<16x64xf32> to vector<16xf32>
    %29 = vector.shape_cast %28 : vector<16xf32> to vector<16x1xf32>
    %30 = arith.mulf %8, %4 : vector<16x64xf32>
    %cst_10 = arith.constant dense<0.000000e+00> : vector<16xf32>
    %31 = vector.multi_reduction <add>, %30, %cst_10 [1] : vector<16x64xf32> to vector<16xf32>
    %32 = vector.shape_cast %31 : vector<16xf32> to vector<16x1xf32>
    %33 = math.exp %10 : vector<16x32xf32>
    %cst_11 = arith.constant dense<0.000000e+00> : vector<16xf32>
    %34 = vector.multi_reduction <add>, %33, %cst_11 [1] : vector<16x32xf32> to vector<16xf32>
    %35 = vector.shape_cast %34 : vector<16xf32> to vector<16x1xf32>
    %36 = math.exp %32 : vector<16x1xf32>
    %37 = arith.subf %35, %36 : vector<16x1xf32>
    %cst_12 = arith.constant 1.000000e-30 : f32
    %38 = vector.broadcast %cst_12 : f32 to vector<16x1xf32>
    %39 = arith.maximumf %37, %38 : vector<16x1xf32>
    %40 = math.log %39 : vector<16x1xf32>
    %41 = arith.subf %40, %29 : vector<16x1xf32>
    %42 = vector.shape_cast %41 : vector<16x1xf32> to vector<1x16x1xf32>
    %cst_13 = arith.constant dense<0.000000e+00> : vector<1xf32>
    %43 = vector.multi_reduction <add>, %42, %cst_13 [1, 2] : vector<1x16x1xf32> to vector<1xf32>
    %44 = vector.shape_cast %43 : vector<1xf32> to vector<1x1x1xf32>
    %45 = vector.extract %44[0, 0, 0] : f32 from vector<1x1x1xf32>
    %46 = vector.broadcast %45 : f32 to vector<1x8x128xf32>
    %c0_14 = arith.constant 0 : index
    %c0_15 = arith.constant 0 : index
    %c0_16 = arith.constant 0 : index
    %47 = vector.load %arg2[%c0_14, %c0_15, %c0_16] : memref<1x8x128xf32, #tpu.memory_space<vmem>>, vector<1x8x128xf32>
    tpu.vector_store %arg2[%c0_14, %c0_15, %c0_16], %46 {strides = array<i32>} : memref<1x8x128xf32, #tpu.memory_space<vmem>>, vector<1x8x128xf32>,
    return
  }
  func.func @transform_0(%arg0: i32) -> (i32, i32) {
    %c0_i32 = arith.constant 0 : i32
    %c0_i32_0 = arith.constant 0 : i32
    %c0_i32_1 = arith.constant 0 : i32
    return %c0_i32, %c0_i32_0 : i32, i32
  }
  func.func @transform_1(%arg0: i32) -> (i32, i32, i32) {
    %c0_i32 = arith.constant 0 : i32
    %c0_i32_0 = arith.constant 0 : i32
    %c0_i32_1 = arith.constant 0 : i32
    return %arg0, %c0_i32, %c0_i32_0 : i32, i32, i32
  }
}

</mosaic_0001>

<llo_original>
// kernel: tpu_custom_call.1
$region0: #{tpu_custom_call.1}
  #allocation0 [shape = 'u32[]', space=smem, size = 0x4, offset = 0x4, fixed_abs, tag = 'smem constant byte address 0x4 - core index']
  #allocation1 [shape = 'u32[72,128]{1,0:T(1,128)}', space=vmem, size = 0x9000, scoped, tag = 'internal scratch']
  %s0 = inlined_call_operand.hbm [shape: bf16[32,64], index: 0, kind: input, shape index: {}]
  %s1 = inlined_call_operand.hbm [shape: f32[2,8,128], index: 1, kind: output, shape index: {}]
  %s2 = sld [smem:[#allocation0]]
  $region41: #{tpu_custom_call.1} parent=0
    _
  %s4 = ssub.s32 1, %s2
  %s5 = scalar_select 0, %s4, %s2
  $region1: #{tpu_custom_call.1} parent=0
    #allocation2 [shape = 'u8[8192]{0}', space=vmem, size = 0x2000, scoped, tag = 'input window, operand 0, single buffered']
    #allocation3 [shape = 's32[2]{0}', space=sflag, size = 0x8, scoped, tag = 'scoped memory for tpu_custom_call.1']
    #allocation4 [shape = 's32[2]{0}', space=sflag, size = 0x8, scoped, tag = 'scoped memory for tpu_custom_call.1']
    #allocation5 [shape = 'u8[8192]{0}', space=vmem, size = 0x2000, scoped, tag = 'output window, operand 0']
    %6 = vsyncpa [#allocation3], 0
    %7 = vsyncpa [#allocation4], 0
    %s8 = scalar_lea.sflag [#allocation4], 1
    %9 = vsyncpa %s8, 0
    loop: start=0, step=1, limit=4
    $region2: #{tpu_custom_call.1} parent=1 // loop_pre_header
      _
    $region3: #{tpu_custom_call.1} parent=1 // loop_header
      %s11 = sphi 0, %s15
      %p12 = scmp.ge.s32.totalorder %s11, 4
      %s19 = sphi 0, %s19
      %s21 = sphi 0, %s19
      %s22 = sphi 0, %s21
      %s36 = sphi 0, %s22
      %s42 = sphi 0, %s44
      %s45 = sphi 0, %s42
      %s46 = sphi 0, %s45
      %s62 = sphi 0, %s46
    $region4: #{tpu_custom_call.1} parent=1 // loop_header_branch
      %14 = sbr.rel (%p12) target = $region8
    $region5: #{tpu_custom_call.1} parent=1 // loop_body
      %s16 = ssub.s32 %s11, 1
      %s17 = ssub.s32 %s11, 2
      %s18 = sadd.s32 %s11, 1
      %s20 = sadd.s32 %s19, 1
      %p23 = scmp.eq.s32.totalorder %s11, 1
      %p24 = scmp.ne.s32.totalorder %s19, %s21
      %p25 = scmp.eq.s32.totalorder %s11, 0
      %p26 = por %p24, %p25
      %p27 = scmp.ne.s32.totalorder %s19, %s21
      %p28 = scmp.eq.s32.totalorder %s16, 1
      %p29 = por %p27, %p28
      %p30 = scmp.ne.s32.totalorder %s21, %s22
      %p31 = scmp.eq.s32.totalorder %s16, 0
      %p32 = por %p30, %p31
      %p33 = scmp.ne.s32.totalorder %s21, %s22
      %p34 = scmp.eq.s32.totalorder %s17, 1
      %p35 = por %p33, %p34
      %p37 = scmp.ne.s32.totalorder %s22, %s36
      %p38 = scmp.eq.s32.totalorder %s17, 0
      %p39 = por %p37, %p38
      %s40 = ssub.s32 %s11, %s18
      %p41 = scmp.eq.s32.totalorder %s40, 0
      %s43 = sadd.s32 %s42, 1
      %s44 = scalar_select %p41, %s42, %s43
      %p47 = pneg %p41
      %p48 = scmp.eq.s32.totalorder %s11, 1
      %p49 = por %p47, %p48
      %p50 = scmp.ne.s32.totalorder %s42, %s45
      %p51 = scmp.eq.s32.totalorder %s11, 0
      %p52 = por %p50, %p51
      %p53 = scmp.ne.s32.totalorder %s42, %s45
      %p54 = scmp.eq.s32.totalorder %s16, 1
      %p55 = por %p53, %p54
      %p56 = scmp.ne.s32.totalorder %s45, %s46
      %p57 = scmp.eq.s32.totalorder %s16, 0
      %p58 = por %p56, %p57
      %p59 = scmp.ne.s32.totalorder %s45, %s46
      %p60 = scmp.eq.s32.totalorder %s17, 1
      %p61 = por %p59, %p60
      %p63 = scmp.ne.s32.totalorder %s46, %s62
      %p64 = scmp.eq.s32.totalorder %s17, 0
      %p65 = por %p63, %p64
      %p66 = scmp.le.s32.totalorder 1, %s11
      %p67 = scmp.lt.s32.totalorder %s11, 3
      %p68 = pnand %p66, %p67
      %p69 = pneg %p68
      // Predicated region
      $region9: #{tpu_custom_call.1} parent=5 // pred_check
        _
      $region10: #{tpu_custom_call.1} parent=5 // pred_check_branch
        %71 = sbr.rel (%p68) target = $region12
      $region11: #{tpu_custom_call.1} parent=5 // pred_region
        %s72 = ssub.s32 %s11, 1
        // Predicated region
        $region13: #{tpu_custom_call.1} parent=11 // pred_check
          %p73 = pneg %p32
        $region14: #{tpu_custom_call.1} parent=11 // pred_check_branch
          %75 = sbr.rel (%p73) target = $region16
        $region15: #{tpu_custom_call.1} parent=11 // pred_region
          %77 = vsyncadd [#allocation3], 0
          %s78 = sshll.u32 %s0, 4
          %s79 = int_to_ptr.hbm [resolvable:$true] %s78
          %s80 = sshll.u32 [#allocation2], 4
          %s81 = int_to_ptr.vmem [resolvable:$true] %s80
          %86 = dma.hbm_to_vmem [thread:$0]  %s79, 256, %s81, [#allocation3], 64, 64, 4
        $region16: #{tpu_custom_call.1} parent=11 // pred_fallthru
          _
      $region12: #{tpu_custom_call.1} parent=5 // pred_fallthru
        _
      %p87 = scmp.lt.s32.totalorder %s11, 2
      // Predicated region
      $region17: #{tpu_custom_call.1} parent=5 // pred_check
        %p88 = pneg %p87
      $region18: #{tpu_custom_call.1} parent=5 // pred_check_branch
        %90 = sbr.rel (%p88) target = $region20
      $region19: #{tpu_custom_call.1} parent=5 // pred_region
        _
      $region20: #{tpu_custom_call.1} parent=5 // pred_fallthru
        _
      %p91 = scmp.le.s32.totalorder 1, %s11
      %p92 = scmp.lt.s32.totalorder %s11, 3
      %p93 = pnand %p91, %p92
      %p94 = pneg %p93
      // Predicated region
      $region21: #{tpu_custom_call.1} parent=5 // pred_check
        _
      $region22: #{tpu_custom_call.1} parent=5 // pred_check_branch
        %96 = sbr.rel (%p93) target = $region24
      $region23: #{tpu_custom_call.1} parent=5 // pred_region
        %s97 = ssub.s32 %s11, 1
        // Predicated region
        $region25: #{tpu_custom_call.1} parent=23 // pred_check
          %p98 = pneg %p32
        $region26: #{tpu_custom_call.1} parent=23 // pred_check_branch
          %100 = sbr.rel (%p98) target = $region28
        $region27: #{tpu_custom_call.1} parent=23 // pred_region
          %102 = dma.done [#allocation3], 256
        $region28: #{tpu_custom_call.1} parent=23 // pred_fallthru
          _
        %p103 = pneg %p32
        %p104 = pneg %p29
        %p105 = pneg %p58
        %p106 = pneg %p55
        %s107 = sand.u32 %s45, 1
        %s108 = scalar_lea.sflag [#allocation4], %s107
        %s109 = sand.u32 %s45, 1
        %s110 = smul.addr %s109, 8
        %s111 = scalar_lea.vmem [#allocation5], %s110
        %s113 = smul.u32 %s16, 16
        %s114 = sshra.s32 %s113, 3
        %s115 = sand.u32 %s113, 7
        %s116 = smul.addr %s114, 4
        %s117 = scalar_lea.vmem [#allocation2], %s116
        %v118 = vld [vmem:[%s117] sm:$0xf]
        %v119 = vld [vmem:[%s117 + $0x4] sm:$0xf]
        %v120 = vunpack.c.l.bf16 %v118
        %v121 = vunpack.c.l.bf16 %v119
        %v122 = vmul.f32 %v120, 2.0
        %v123 = vmul.f32 %v121, 2.0
        %v124 = vpack.c.bf16 %v122, %v122
        %v125 = vpack.c.bf16 %v123, %v123
        %v126 = vunpack.c.l.bf16 %v124
        %v127 = vunpack.c.l.bf16 %v125
        %v128 = vld [vmem:[#allocation2] sm:$0xf]
        %v129 = vld [vmem:[#allocation2 + $0x4] sm:$0xf]
        %v130 = vld [vmem:[#allocation2 + $0x8] sm:$0xf]
        %v131 = vld [vmem:[#allocation2 + $0xc] sm:$0xf]
        %v134 = vunpack.c.l.b16 %v124
        %v135 = vunpack.c.l.b16 %v125
        %v136 = vpack.c.b16 %v135, %v134
        %v141 = vunpack.c.l.b16 %v128
        %v142 = vunpack.c.l.b16 %v129
        %v143 = vunpack.c.l.b16 %v130
        %v144 = vunpack.c.l.b16 %v131
        %v145 = vpack.c.b16 %v142, %v141
        %v146 = vpack.c.b16 %v144, %v143
        %vm147 = vcmask 523264
        %v149 = vsel %vm147, %v136, 0
        %v152 = vsel %vm147, %v145, 0
        %v155 = vsel %vm147, %v146, 0
        %157 = vmatpush.bf16.xpose.msra.mxu0 0
        %158 = vmatpush.bf16.xpose.msra.mxu0 0
        %159 = vmatpush.bf16.xpose.msra.mxu0 0
        %160 = vmatpush.bf16.xpose.msra.mxu0 0
        %161 = vmatpush.bf16.xpose.msra.mxu0 0
        %162 = vmatpush.bf16.xpose.msra.mxu0 0
        %163 = vmatpush.bf16.xpose.msra.mxu0 %v155
        %164 = vmatpush.bf16.xpose.msra.mxu0 %v152
        %165 = vmatmul.bf16.gmra.mxu0 %v149
        %v166 = vpop.f32.mrf.mxu0
        %v167 = vadd.f32 0.0, %v166
        %v168 = vpop.f32.mrf.mxu0
        %v169 = vadd.f32 0.0, %v168
        %170 = vdwg.mxu0
        %s171 = sadd.s32 %s113, 16
        %p172 = scmp.lt.s32.totalorder %s171, 0
        %s173 = ssub.s32 0, %s171
        %s174 = scalar_select %p172, %s173, %s171
        %s175 = sand.u32 %s174, 31
        %s176 = ssub.s32 0, %s175
        %s177 = scalar_select %p172, %s176, %s175
        %p178 = scmp.ne.s32.totalorder %s177, 0
        %p179 = scmp.lt.s32.totalorder %s177, 0
        %p180 = pnand %p179, %p178
        %p181 = pneg %p180
        %s182 = sadd.s32 %s177, 32
        %s183 = scalar_select %p181, %s182, %s177
        %s184 = sshra.s32 %s183, 3
        %s185 = sand.u32 %s183, 7
        %s186 = smul.addr %s184, 4
        %s187 = scalar_lea.vmem [#allocation2], %s186
        %v188 = vld [vmem:[%s187] sm:$0xf]
        %v189 = vld [vmem:[%s187 + $0x4] sm:$0xf]
        %v190 = vunpack.c.l.bf16 %v188
        %v191 = vunpack.c.l.bf16 %v189
        %v192 = vmul.f32 %v126, %v190
        %v193 = vmul.f32 %v127, %v191
        %v194 = vsel %vm147, %v192, 0.0
        %195 = vadd.xlane.f32.xlu0 %v194
        %v196 = vpop.xlane.xlu0 %195
        %v197 = vsel %vm147, %v193, 0.0
        %198 = vadd.xlane.f32.xlu0 %v197
        %v199 = vpop.xlane.xlu0 %198
        %v200 = vmul.f32 %v126, %v120
        %v201 = vmul.f32 %v127, %v121
        %v202 = vsel %vm147, %v200, 0.0
        %203 = vadd.xlane.f32.xlu0 %v202
        %v204 = vpop.xlane.xlu0 %203
        %v205 = vsel %vm147, %v201, 0.0
        %206 = vadd.xlane.f32.xlu0 %v205
        %v207 = vpop.xlane.xlu0 %206
        %v208 = vmul.f32 %v167, 1.442695
        %v209 = vpow.pop %v208
        %v210 = vmul.f32 %v169, 1.442695
        %v211 = vpow.pop %v210
        %vm212 = vcmask 261120
        %v213 = vsel %vm212, %v209, 0.0
        %214 = vadd.xlane.f32.xlu0 %v213
        %v215 = vpop.xlane.xlu0 %214
        %v216 = vsel %vm212, %v211, 0.0
        %217 = vadd.xlane.f32.xlu0 %v216
        %v218 = vpop.xlane.xlu0 %217
        %v219 = vmul.f32 %v204, 1.442695
        %v220 = vpow.pop %v219
        %v221 = vmul.f32 %v207, 1.442695
        %v222 = vpow.pop %v221
        %v223 = vsub.f32 %v215, %v220
        %v224 = vsub.f32 %v218, %v222
        %v225 = vmax.f32 %v223, 1e-30
        %v226 = vmax.f32 %v224, 1e-30
        %v227 = vlog2.pop %v225
        %v228 = vmul.f32 %v227, 0.6931472
        %v229 = vlog2.pop %v226
        %v230 = vmul.f32 %v229, 0.6931472
        %v231 = vsub.f32 %v228, %v196
        %v232 = vsub.f32 %v230, %v199
        %vm233 = vcmask 7168
        %v234 = vsel %vm233, %v231, 0.0
        %v235 = vsel %vm233, %v232, 0.0
        %v236 = vadd.f32 %v234, %v235
        %237 = vadd.xlane.f32.xlu0 %v236
        %v238 = vpop.xlane.xlu0 %237
        %v239 = vrot.slane %v238, 4
        %v240 = vadd.f32 %v238, %v239
        %v241 = vrot.slane %v240, 2
        %v242 = vadd.f32 %v240, %v241
        %v243 = vrot.slane %v242, 1
        %v244 = vadd.f32 %v242, %v243
        %s245 = vtos %v244
        %v246 = vstv %s245
        %247 = vst [vmem:[%s111] sm:$0xff] %v246
        %s248 = sand.u32 %s45, 1
        %s249 = scalar_lea.sflag [#allocation4], %s248
        %s250 = sand.u32 %s45, 1
        %s251 = smul.addr %s250, 8
        %s252 = scalar_lea.vmem [#allocation5], %s251
        // Predicated region
        $region29: #{tpu_custom_call.1} parent=23 // pred_check
          %p253 = pneg %p55
        $region30: #{tpu_custom_call.1} parent=23 // pred_check_branch
          %255 = sbr.rel (%p253) target = $region32
        $region31: #{tpu_custom_call.1} parent=23 // pred_region
          %257 = vsyncadd %s249, 0
          %s258 = smul.addr %s16, 8
          %s259 = scalar_lea.hbm %s1, %s258
          %s261 = sshll.u32 %s252, 4
          %s262 = int_to_ptr.vmem [resolvable:$true] %s261
          %s263 = sshll.u32 %s259, 4
          %s264 = int_to_ptr.hbm [resolvable:$true] %s263
          %266 = dma.vmem_to_hbm [thread:$0]  %s262, 128, %s264, %s249
        $region32: #{tpu_custom_call.1} parent=23 // pred_fallthru
          _
      $region24: #{tpu_custom_call.1} parent=5 // pred_fallthru
        _
      %p267 = scmp.le.s32.totalorder 2, %s11
      // Predicated region
      $region33: #{tpu_custom_call.1} parent=5 // pred_check
        %p268 = pneg %p267
      $region34: #{tpu_custom_call.1} parent=5 // pred_check_branch
        %270 = sbr.rel (%p268) target = $region36
      $region35: #{tpu_custom_call.1} parent=5 // pred_region
        %s271 = ssub.s32 %s11, 2
        // Predicated region
        $region37: #{tpu_custom_call.1} parent=35 // pred_check
          %p272 = pneg %p61
        $region38: #{tpu_custom_call.1} parent=35 // pred_check_branch
          %274 = sbr.rel (%p272) target = $region40
        $region39: #{tpu_custom_call.1} parent=35 // pred_region
          %s275 = sand.u32 %s46, 1
          %s276 = scalar_lea.sflag [#allocation4], %s275
          %s277 = sand.u32 %s46, 1
          %s278 = smul.addr %s277, 8
          %s279 = scalar_lea.vmem [#allocation5], %s278
          %281 = dma.done %s276, 128
        $region40: #{tpu_custom_call.1} parent=35 // pred_fallthru
          _
      $region36: #{tpu_custom_call.1} parent=5 // pred_fallthru
        _
    $region6: #{tpu_custom_call.1} parent=1 // loop_footer
      %s15 = sadd.s32 1, %s11
    $region7: #{tpu_custom_call.1} parent=1 // loop_footer_branch
      %10 = sbr.rel target = $region3
    $region8: #{tpu_custom_call.1} parent=1 // loop_exit
      _
    %282 = vsyncpa [#allocation3], 1
    %s283 = scalar_lea.sflag [#allocation3], 1
    %284 = vsyncpa %s283, 1
    %285 = vsyncpa [#allocation4], 1
    %s286 = scalar_lea.sflag [#allocation4], 1
    %287 = vsyncpa %s286, 1

// kernel: tpu_custom_call.1
$region0: #{tpu_custom_call.1}
  #allocation0 [shape = 'u32[]', space=smem, size = 0x4, offset = 0x4, fixed_abs, tag = 'smem constant byte address 0x4 - core index']
  #allocation1 [shape = 'u32[72,128]{1,0:T(1,128)}', space=vmem, size = 0x9000, scoped, tag = 'internal scratch']
  %s0 = inlined_call_operand.hbm [shape: bf16[32,64], index: 0, kind: input, shape index: {}]
  %s1 = inlined_call_operand.hbm [shape: f32[2,8,128], index: 1, kind: output, shape index: {}]
  %s2 = sld [smem:[#allocation0]]
  $region41: #{tpu_custom_call.1} parent=0
    _
  %s4 = ssub.s32 1, %s2
  %s5 = scalar_select 0, %s4, %s2
  $region1: #{tpu_custom_call.1} parent=0
    #allocation2 [shape = 'u8[8192]{0}', space=vmem, size = 0x2000, scoped, tag = 'input window, operand 0, single buffered']
    #allocation3 [shape = 's32[2]{0}', space=sflag, size = 0x8, scoped, tag = 'scoped memory for tpu_custom_call.1']
    #allocation4 [shape = 's32[2]{0}', space=sflag, size = 0x8, scoped, tag = 'scoped memory for tpu_custom_call.1']
    #allocation5 [shape = 'u8[8192]{0}', space=vmem, size = 0x2000, scoped, tag = 'output window, operand 0']
    %6 = vsyncpa [#allocation3], 0
    %7 = vsyncpa [#allocation4], 0
    %s8 = scalar_lea.sflag [#allocation4], 1
    %9 = vsyncpa %s8, 0
    loop: start=0, step=1, limit=4
    $region2: #{tpu_custom_call.1} parent=1 // loop_pre_header
      _
    $region3: #{tpu_custom_call.1} parent=1 // loop_header
      %s11 = sphi 0, %s15
      %p12 = scmp.ge.s32.totalorder %s11, 4
      %s19 = sphi 0, %s19
      %s21 = sphi 0, %s19
      %s22 = sphi 0, %s21
      %s36 = sphi 0, %s22
      %s42 = sphi 0, %s44
      %s45 = sphi 0, %s42
      %s46 = sphi 0, %s45
      %s62 = sphi 0, %s46
    $region4: #{tpu_custom_call.1} parent=1 // loop_header_branch
      %14 = sbr.rel (%p12) target = $region8
    $region5: #{tpu_custom_call.1} parent=1 // loop_body
      %s16 = ssub.s32 %s11, 1
      %s17 = ssub.s32 %s11, 2
      %s18 = sadd.s32 %s11, 1
      %s20 = sadd.s32 %s19, 1
      %p23 = scmp.eq.s32.totalorder %s11, 1
      %p24 = scmp.ne.s32.totalorder %s19, %s21
      %p25 = scmp.eq.s32.totalorder %s11, 0
      %p26 = por %p24, %p25
      %p27 = scmp.ne.s32.totalorder %s19, %s21
      %p28 = scmp.eq.s32.totalorder %s16, 1
      %p29 = por %p27, %p28
      %p30 = scmp.ne.s32.totalorder %s21, %s22
      %p31 = scmp.eq.s32.totalorder %s16, 0
      %p32 = por %p30, %p31
      %p33 = scmp.ne.s32.totalorder %s21, %s22
      %p34 = scmp.eq.s32.totalorder %s17, 1
      %p35 = por %p33, %p34
      %p37 = scmp.ne.s32.totalorder %s22, %s36
      %p38 = scmp.eq.s32.totalorder %s17, 0
      %p39 = por %p37, %p38
      %s40 = ssub.s32 %s11, %s18
      %p41 = scmp.eq.s32.totalorder %s40, 0
      %s43 = sadd.s32 %s42, 1
      %s44 = scalar_select %p41, %s42, %s43
      %p47 = pneg %p41
      %p48 = scmp.eq.s32.totalorder %s11, 1
      %p49 = por %p47, %p48
      %p50 = scmp.ne.s32.totalorder %s42, %s45
      %p51 = scmp.eq.s32.totalorder %s11, 0
      %p52 = por %p50, %p51
      %p53 = scmp.ne.s32.totalorder %s42, %s45
      %p54 = scmp.eq.s32.totalorder %s16, 1
      %p55 = por %p53, %p54
      %p56 = scmp.ne.s32.totalorder %s45, %s46
      %p57 = scmp.eq.s32.totalorder %s16, 0
      %p58 = por %p56, %p57
      %p59 = scmp.ne.s32.totalorder %s45, %s46
      %p60 = scmp.eq.s32.totalorder %s17, 1
      %p61 = por %p59, %p60
      %p63 = scmp.ne.s32.totalorder %s46, %s62
      %p64 = scmp.eq.s32.totalorder %s17, 0
      %p65 = por %p63, %p64
      %p66 = scmp.le.s32.totalorder 1, %s11
      %p67 = scmp.lt.s32.totalorder %s11, 3
      %p68 = pnand %p66, %p67
      %p69 = pneg %p68
      // Predicated region
      $region9: #{tpu_custom_call.1} parent=5 // pred_check
        _
      $region10: #{tpu_custom_call.1} parent=5 // pred_check_branch
        %71 = sbr.rel (%p68) target = $region12
      $region11: #{tpu_custom_call.1} parent=5 // pred_region
        %s72 = ssub.s32 %s11, 1
        // Predicated region
        $region13: #{tpu_custom_call.1} parent=11 // pred_check
          %p73 = pneg %p32
        $region14: #{tpu_custom_call.1} parent=11 // pred_check_branch
          %75 = sbr.rel (%p73) target = $region16
        $region15: #{tpu_custom_call.1} parent=11 // pred_region
          %77 = vsyncadd [#allocation3], 0
          %s78 = sshll.u32 %s0, 4
          %s79 = int_to_ptr.hbm [resolvable:$true] %s78
          %s80 = sshll.u32 [#allocation2], 4
          %s81 = int_to_ptr.vmem [resolvable:$true] %s80
          %86 = dma.hbm_to_vmem [thread:$0]  %s79, 256, %s81, [#allocation3], 64, 64, 4
        $region16: #{tpu_custom_call.1} parent=11 // pred_fallthru
          _
      $region12: #{tpu_custom_call.1} parent=5 // pred_fallthru
        _
      %p87 = scmp.lt.s32.totalorder %s11, 2
      // Predicated region
      $region17: #{tpu_custom_call.1} parent=5 // pred_check
        %p88 = pneg %p87
      $region18: #{tpu_custom_call.1} parent=5 // pred_check_branch
        %90 = sbr.rel (%p88) target = $region20
      $region19: #{tpu_custom_call.1} parent=5 // pred_region
        _
      $region20: #{tpu_custom_call.1} parent=5 // pred_fallthru
        _
      %p91 = scmp.le.s32.totalorder 1, %s11
      %p92 = scmp.lt.s32.totalorder %s11, 3
      %p93 = pnand %p91, %p92
      %p94 = pneg %p93
      // Predicated region
      $region21: #{tpu_custom_call.1} parent=5 // pred_check
        _
      $region22: #{tpu_custom_call.1} parent=5 // pred_check_branch
        %96 = sbr.rel (%p93) target = $region24
      $region23: #{tpu_custom_call.1} parent=5 // pred_region
        %s97 = ssub.s32 %s11, 1
        // Predicated region
        $region25: #{tpu_custom_call.1} parent=23 // pred_check
          %p98 = pneg %p32
        $region26: #{tpu_custom_call.1} parent=23 // pred_check_branch
          %100 = sbr.rel (%p98) target = $region28
        $region27: #{tpu_custom_call.1} parent=23 // pred_region
          %102 = dma.done [#allocation3], 256
        $region28: #{tpu_custom_call.1} parent=23 // pred_fallthru
          _
        %p103 = pneg %p32
        %p104 = pneg %p29
        %p105 = pneg %p58
        %p106 = pneg %p55
        %s107 = sand.u32 %s45, 1
        %s108 = scalar_lea.sflag [#allocation4], %s107
        %s109 = sand.u32 %s45, 1
        %s110 = smul.addr %s109, 8
        %s111 = scalar_lea.vmem [#allocation5], %s110
        %s113 = smul.u32 %s16, 16
        %s114 = sshra.s32 %s113, 3
        %s115 = sand.u32 %s113, 7
        %s116 = smul.addr %s114, 4
        %s117 = scalar_lea.vmem [#allocation2], %s116
        %v118 = vld [vmem:[%s117] sm:$0xf]
        %v119 = vld [vmem:[%s117 + $0x4] sm:$0xf]
        %v120 = vunpack.c.l.bf16 %v118
        %v121 = vunpack.c.l.bf16 %v119
        %v122 = vmul.f32 %v120, 2.0
        %v123 = vmul.f32 %v121, 2.0
        %v124 = vpack.c.bf16 %v122, %v122
        %v125 = vpack.c.bf16 %v123, %v123
        %v126 = vunpack.c.l.bf16 %v124
        %v127 = vunpack.c.l.bf16 %v125
        %v128 = vld [vmem:[#allocation2] sm:$0xf]
        %v129 = vld [vmem:[#allocation2 + $0x4] sm:$0xf]
        %v130 = vld [vmem:[#allocation2 + $0x8] sm:$0xf]
        %v131 = vld [vmem:[#allocation2 + $0xc] sm:$0xf]
        %v134 = vunpack.c.l.b16 %v124
        %v135 = vunpack.c.l.b16 %v125
        %v136 = vpack.c.b16 %v135, %v134
        %v141 = vunpack.c.l.b16 %v128
        %v142 = vunpack.c.l.b16 %v129
        %v143 = vunpack.c.l.b16 %v130
        %v144 = vunpack.c.l.b16 %v131
        %v145 = vpack.c.b16 %v142, %v141
        %v146 = vpack.c.b16 %v144, %v143
        %vm147 = vcmask 523264
        %v149 = vsel %vm147, %v136, 0
        %v152 = vsel %vm147, %v145, 0
        %v155 = vsel %vm147, %v146, 0
        %157 = vmatpush.bf16.xpose.msra.mxu0 0
        %158 = vmatpush.bf16.xpose.msra.mxu0 0
        %159 = vmatpush.bf16.xpose.msra.mxu0 0
        %160 = vmatpush.bf16.xpose.msra.mxu0 0
        %161 = vmatpush.bf16.xpose.msra.mxu0 0
        %162 = vmatpush.bf16.xpose.msra.mxu0 0
        %163 = vmatpush.bf16.xpose.msra.mxu0 %v155
        %164 = vmatpush.bf16.xpose.msra.mxu0 %v152
        %165 = vmatmul.bf16.gmra.mxu0 %v149
        %v166 = vpop.f32.mrf.mxu0
        %v167 = vadd.f32 0.0, %v166
        %v168 = vpop.f32.mrf.mxu0
        %v169 = vadd.f32 0.0, %v168
        %170 = vdwg.mxu0
        %s171 = sadd.s32 %s113, 16
        %p172 = scmp.lt.s32.totalorder %s171, 0
        %s173 = ssub.s32 0, %s171
        %s174 = scalar_select %p172, %s173, %s171
        %s175 = sand.u32 %s174, 31
        %s176 = ssub.s32 0, %s175
        %s177 = scalar_select %p172, %s176, %s175
        %p178 = scmp.ne.s32.totalorder %s177, 0
        %p179 = scmp.lt.s32.totalorder %s177, 0
        %p180 = pnand %p179, %p178
        %p181 = pneg %p180
        %s182 = sadd.s32 %s177, 32
        %s183 = scalar_select %p181, %s182, %s177
        %s184 = sshra.s32 %s183, 3
        %s185 = sand.u32 %s183, 7
        %s186 = smul.addr %s184, 4
        %s187 = scalar_lea.vmem [#allocation2], %s186
        %v188 = vld [vmem:[%s187] sm:$0xf]
        %v189 = vld [vmem:[%s187 + $0x4] sm:$0xf]
        %v190 = vunpack.c.l.bf16 %v188
        %v191 = vunpack.c.l.bf16 %v189
        %v192 = vmul.f32 %v126, %v190
        %v193 = vmul.f32 %v127, %v191
        %v194 = vsel %vm147, %v192, 0.0
        %195 = vadd.xlane.f32.xlu0 %v194
        %v196 = vpop.xlane.xlu0 %195
        %v197 = vsel %vm147, %v193, 0.0
        %198 = vadd.xlane.f32.xlu0 %v197
        %v199 = vpop.xlane.xlu0 %198
        %v200 = vmul.f32 %v126, %v120
        %v201 = vmul.f32 %v127, %v121
        %v202 = vsel %vm147, %v200, 0.0
        %203 = vadd.xlane.f32.xlu0 %v202
        %v204 = vpop.xlane.xlu0 %203
        %v205 = vsel %vm147, %v201, 0.0
        %206 = vadd.xlane.f32.xlu0 %v205
        %v207 = vpop.xlane.xlu0 %206
        %v208 = vmul.f32 %v167, 1.442695
        %v209 = vpow.pop %v208
        %v210 = vmul.f32 %v169, 1.442695
        %v211 = vpow.pop %v210
        %vm212 = vcmask 261120
        %v213 = vsel %vm212, %v209, 0.0
        %214 = vadd.xlane.f32.xlu0 %v213
        %v215 = vpop.xlane.xlu0 %214
        %v216 = vsel %vm212, %v211, 0.0
        %217 = vadd.xlane.f32.xlu0 %v216
        %v218 = vpop.xlane.xlu0 %217
        %v219 = vmul.f32 %v204, 1.442695
        %v220 = vpow.pop %v219
        %v221 = vmul.f32 %v207, 1.442695
        %v222 = vpow.pop %v221
        %v223 = vsub.f32 %v215, %v220
        %v224 = vsub.f32 %v218, %v222
        %v225 = vmax.f32 %v223, 1e-30
        %v226 = vmax.f32 %v224, 1e-30
        %v227 = vlog2.pop %v225
        %v228 = vmul.f32 %v227, 0.6931472
        %v229 = vlog2.pop %v226
        %v230 = vmul.f32 %v229, 0.6931472
        %v231 = vsub.f32 %v228, %v196
        %v232 = vsub.f32 %v230, %v199
        %vm233 = vcmask 7168
        %v234 = vsel %vm233, %v231, 0.0
        %v235 = vsel %vm233, %v232, 0.0
        %v236 = vadd.f32 %v234, %v235
        %237 = vadd.xlane.f32.xlu0 %v236
        %v238 = vpop.xlane.xlu0 %237
        %v239 = vrot.slane %v238, 4
        %v240 = vadd.f32 %v238, %v239
        %v241 = vrot.slane %v240, 2
        %v242 = vadd.f32 %v240, %v241
        %v243 = vrot.slane %v242, 1
        %v244 = vadd.f32 %v242, %v243
        %s245 = vtos %v244
        %v246 = vstv %s245
        %247 = vst [vmem:[%s111] sm:$0xff] %v246
        %s248 = sand.u32 %s45, 1
        %s249 = scalar_lea.sflag [#allocation4], %s248
        %s250 = sand.u32 %s45, 1
        %s251 = smul.addr %s250, 8
        %s252 = scalar_lea.vmem [#allocation5], %s251
        // Predicated region
        $region29: #{tpu_custom_call.1} parent=23 // pred_check
          %p253 = pneg %p55
        $region30: #{tpu_custom_call.1} parent=23 // pred_check_branch
          %255 = sbr.rel (%p253) target = $region32
        $region31: #{tpu_custom_call.1} parent=23 // pred_region
          %257 = vsyncadd %s249, 0
          %s258 = smul.addr %s16, 8
          %s259 = scalar_lea.hbm %s1, %s258
          %s261 = sshll.u32 %s252, 4
          %s262 = int_to_ptr.vmem [resolvable:$true] %s261
          %s263 = sshll.u32 %s259, 4
          %s264 = int_to_ptr.hbm [resolvable:$true] %s263
          %266 = dma.vmem_to_hbm [thread:$0]  %s262, 128, %s264, %s249
        $region32: #{tpu_custom_call.1} parent=23 // pred_fallthru
          _
      $region24: #{tpu_custom_call.1} parent=5 // pred_fallthru
        _
      %p267 = scmp.le.s32.totalorder 2, %s11
      // Predicated region
      $region33: #{tpu_custom_call.1} parent=5 // pred_check
        %p268 = pneg %p267
      $region34: #{tpu_custom_call.1} parent=5 // pred_check_branch
        %270 = sbr.rel (%p268) target = $region36
      $region35: #{tpu_custom_call.1} parent=5 // pred_region
        %s271 = ssub.s32 %s11, 2
        // Predicated region
        $region37: #{tpu_custom_call.1} parent=35 // pred_check
          %p272 = pneg %p61
        $region38: #{tpu_custom_call.1} parent=35 // pred_check_branch
          %274 = sbr.rel (%p272) target = $region40
        $region39: #{tpu_custom_call.1} parent=35 // pred_region
          %s275 = sand.u32 %s46, 1
          %s276 = scalar_lea.sflag [#allocation4], %s275
          %s277 = sand.u32 %s46, 1
          %s278 = smul.addr %s277, 8
          %s279 = scalar_lea.vmem [#allocation5], %s278
          %281 = dma.done %s276, 128
        $region40: #{tpu_custom_call.1} parent=35 // pred_fallthru
          _
      $region36: #{tpu_custom_call.1} parent=5 // pred_fallthru
        _
    $region6: #{tpu_custom_call.1} parent=1 // loop_footer
      %s15 = sadd.s32 1, %s11
    $region7: #{tpu_custom_call.1} parent=1 // loop_footer_branch
      %10 = sbr.rel target = $region3
    $region8: #{tpu_custom_call.1} parent=1 // loop_exit
      _
    %282 = vsyncpa [#allocation3], 1
    %s283 = scalar_lea.sflag [#allocation3], 1
    %284 = vsyncpa %s283, 1
    %285 = vsyncpa [#allocation4], 1
    %s286 = scalar_lea.sflag [#allocation4], 1
    %287 = vsyncpa %s286, 1

</llo_original>
